<compile_context>
chip_gen: v5e
topology: v5e:2x2
jax: 0.10.0
libtpu: 0.0.40
codegen_flags: <defaults>
</compile_context>

<pallas_src>
import numpy as np
import jax
import jax.numpy as jnp
from jax.experimental import pallas as pl
from jax.experimental.pallas import tpu as pltpu

_LANE = 128
_SINGLE_BUFFER_BYTES = 4 * 1024 * 1024


def _round_up(x, m):
    return (x + m - 1) // m * m


def _vmem_limit_bytes():
    # Generation-aware VMEM ceiling: ~85% of physical (≈54 MiB on v7x's 64 MiB,
    # ≈108 MiB on v5e/v6e's 128 MiB).  Conservative fallback if the query is
    # unavailable (e.g. interpret mode).
    try:
        cap = getattr(pltpu.get_tpu_info(), "vmem_capacity_bytes", None)
        if cap:
            return max(32 * 1024 * 1024, int(cap * 0.85))
    except Exception:
        pass
    return 48 * 1024 * 1024


def _pick_row_tile(H, W):
    # Row tile TR so the bottleneck MXU M-tile (TR*(W+2)) is ~256 rows (fills
    # the 256-wide v6e/v7x MXU; still fine on v5e) and TR divides H exactly.
    target = max(1, 256 // (W + 2))
    tr = min(H, target)
    while H % tr:
        tr -= 1
    return tr


def _bspec(shape, index_map, nbytes=0):
    # Grid-invariant operands above a few MB are requested single-buffered so
    # default double buffering doesn't blow the VMEM budget (v7x: 64 MiB).
    # Plain spec fallback keeps the call working if pipeline_mode is absent.
    if nbytes >= _SINGLE_BUFFER_BYTES and hasattr(pl, "Buffered"):
        try:
            return pl.BlockSpec(shape, index_map, pipeline_mode=pl.Buffered(1))
        except TypeError:
            pass
    return pl.BlockSpec(shape, index_map)


# --------------------------------------------------------------------------
# Kernel 1: fused pyramid stages -> masked y  (pool -> 1x1 conv + BN + ReLU)
# --------------------------------------------------------------------------

def _stage_y_kernel(x_ref, p_ref, w_ref, b_ref, m_ref, y_ref):
    # x_ref: (1, HW, Cin_p) bf16   flattened NHWC features (one batch)
    # p_ref: (Qt, HW)       bf16   stacked adaptive-avg-pool matrices
    # w_ref: (Cin_p, S_p)   bf16   stage 1x1 weights (BN scale folded), padded
    # b_ref: (1, S_p)       f32    stage BN beta
    # m_ref: (Qt, S_p)      f32    block-diagonal (pool-row, stage-channel) mask
    # y_ref: (1, Qt, S_p)   bf16   masked stage activations
    pooled = jnp.dot(p_ref[...], x_ref[0],
                     preferred_element_type=jnp.float32)          # (Qt, Cin_p)
    y = jnp.dot(pooled.astype(jnp.bfloat16), w_ref[...],
                preferred_element_type=jnp.float32)               # (Qt, S_p)
    y = jnp.maximum(y + b_ref[...], 0.0) * m_ref[...]
    y_ref[0] = y.astype(jnp.bfloat16)


def _stage_y_call(x_flat, p):
    N, HW, Cin_p = x_flat.shape
    Qt, S_p = p['mask'].shape
    return pl.pallas_call(
        _stage_y_kernel,
        out_shape=jax.ShapeDtypeStruct((N, Qt, S_p), jnp.bfloat16),
        grid=(N,),
        in_specs=[
            pl.BlockSpec((1, HW, Cin_p), lambda n: (n, 0, 0)),
            _bspec((Qt, HW), lambda n: (0, 0), Qt * HW * 2),
            _bspec((Cin_p, S_p), lambda n: (0, 0), Cin_p * S_p * 2),
            _bspec((1, S_p), lambda n: (0, 0)),
            _bspec((Qt, S_p), lambda n: (0, 0)),
        ],
        out_specs=pl.BlockSpec((1, Qt, S_p), lambda n: (n, 0, 0)),
        compiler_params=pltpu.CompilerParams(
            dimension_semantics=("parallel",),
            vmem_limit_bytes=_vmem_limit_bytes()),
    )(x_flat, p['P_all'], p['W_cat'], p['bias_cat'], p['mask'])


# --------------------------------------------------------------------------
# Kernel 2: fused bilinear-upsample + concat + 3x3 conv + BN + ReLU
#           (row-tiled; halo stage channels generated on the fly from y)
# --------------------------------------------------------------------------

def _bottleneck_call(y, u_tiles, xh, p):
    N = y.shape[0]
    R, L, Qt = u_tiles.shape
    Cin_p = xh.shape[-1]
    S_p, Co_p = p['S_p'], p['Co_p']
    TR, W = p['TR'], p['W']
    Wh = W + 2
    M = TR * Wh                      # rows per output tile (2 garbage cols/row)

    def kernel(y_ref, u_ref, xh_ref, ws_ref, wx_ref, b_ref, o_ref):
        # y_ref:  (1, Qt, S_p)      bf16  masked stage activations (this batch)
        # u_ref:  (1, L, Qt)        bf16  halo'd, spatially zero-padded upsample
        #                                 rows for this row tile (flat layout)
        # xh_ref: (1, 1, L, Cin_p)  bf16  halo'd zero-padded input features, flat
        # ws_ref: (9, S_p, Co_p)    bf16  per-tap weights, stage channels
        # wx_ref: (9, Cin_p, Co_p)  bf16  per-tap weights, feature channels
        # b_ref:  (1, Co_p)         f32   bottleneck BN beta
        # o_ref:  (1, 1, M, Co_p)   f32
        up = jnp.dot(u_ref[0], y_ref[0],
                     preferred_element_type=jnp.float32)           # (L, S_p)
        up = up.astype(jnp.bfloat16)
        xt = xh_ref[0, 0]                                          # (L, Cin_p)
        # Pure dot-accumulate chain over the 9 taps (flat-slab windows); the
        # bias is added exactly once after the last dot.
        acc = jnp.zeros((M, Co_p), jnp.float32)
        for ky in range(3):
            for kx in range(3):
                off = ky * Wh + kx
                t = ky * 3 + kx
                acc = acc + jnp.dot(up[off:off + M], ws_ref[t],
                                    preferred_element_type=jnp.float32)
                acc = acc + jnp.dot(xt[off:off + M], wx_ref[t],
                                    preferred_element_type=jnp.float32)
        o_ref[0, 0] = jnp.maximum(acc + b_ref[...], 0.0)

    flops = 2 * N * R * (M * 9 * (S_p + Cin_p) * Co_p + L * Qt * S_p)
    bytes_accessed = int(y.size * 2 + u_tiles.size * 2 + xh.size * 2
                         + p['w_s'].size * 2 + p['w_x'].size * 2
                         + p['bias_b'].size * 4 + N * R * M * Co_p * 4)
    return pl.pallas_call(
        kernel,
        out_shape=jax.ShapeDtypeStruct((N, R, M, Co_p), jnp.float32),
        grid=(N, R),
        in_specs=[
            pl.BlockSpec((1, Qt, S_p), lambda n, r: (n, 0, 0)),
            pl.BlockSpec((1, L, Qt), lambda n, r: (r, 0, 0)),
            pl.BlockSpec((1, 1, L, Cin_p), lambda n, r: (n, r, 0, 0)),
            _bspec((9, S_p, Co_p), lambda n, r: (0, 0, 0), 9 * S_p * Co_p * 2),
            _bspec((9, Cin_p, Co_p), lambda n, r: (0, 0, 0), 9 * Cin_p * Co_p * 2),
            _bspec((1, Co_p), lambda n, r: (0, 0)),
        ],
        out_specs=pl.BlockSpec((1, 1, M, Co_p), lambda n, r: (n, r, 0, 0)),
        compiler_params=pltpu.CompilerParams(
            dimension_semantics=("parallel", "parallel"),
            vmem_limit_bytes=_vmem_limit_bytes()),
        cost_estimate=pl.CostEstimate(flops=flops, transcendentals=0,
                                      bytes_accessed=bytes_accessed),
    )(y, u_tiles, xh, p['w_s'], p['w_x'], p['bias_b'])


# --------------------------------------------------------------------------
# Glue: pooling / upsample matrices, parameters, forward wrapper, reference
# --------------------------------------------------------------------------

def _adaptive_pool_mat(in_size, out_size):
    # AdaptiveAvgPool2d semantics: start=floor(i*I/O), end=ceil((i+1)*I/O)
    m = np.zeros((out_size, in_size), np.float32)
    for i in range(out_size):
        s = (i * in_size) // out_size
        e = -(-((i + 1) * in_size) // out_size)
        m[i, s:e] = 1.0 / float(e - s)
    return m


def _bilinear_mat(out_size, in_size):
    # F.interpolate(mode='bilinear', align_corners=True), separable 1-D weights
    m = np.zeros((out_size, in_size), np.float32)
    if in_size == 1:
        m[:, 0] = 1.0
        return m
    for o in range(out_size):
        src = o * (in_size - 1) / (out_size - 1)
        i0 = min(int(np.floor(src)), in_size - 2)
        f = src - i0
        m[o, i0] += 1.0 - f
        m[o, i0 + 1] += f
    return m


def init_params(key, in_channels, pool_sizes, H, W, eps=1e-5):
    n_stage = len(pool_sizes)
    Cin = in_channels
    Co = in_channels // n_stage            # per-stage + bottleneck out channels
    S = n_stage * Co                       # total stage channels
    S_p = _round_up(S, _LANE)
    Co_p = _round_up(Co, _LANE)
    Cin_p = _round_up(Cin, _LANE)
    HW = H * W
    Qt = int(sum(b * b for b in pool_sizes))

    TR = _pick_row_tile(H, W)
    R = H // TR
    Hh, Wh = TR + 2, W + 2
    # Flat halo length; +2 extra rows so the flat-slab tap windows never run
    # off the end (max window end = Hh*Wh + 2), rounded to a sublane multiple.
    L = _round_up(Hh * Wh + 2, 8)

    keys = jax.random.split(key, 3 * n_stage + 3)

    P_rows, U_cols = [], []
    W_cat = np.zeros((Cin_p, S_p), np.float32)
    bias_cat = np.zeros((1, S_p), np.float32)
    mask = np.zeros((Qt, S_p), np.float32)
    ref_stage_w, ref_stage_b, ref_P, ref_U = [], [], [], []
    off = 0
    for s, b in enumerate(pool_sizes):
        kw, kg, kb = keys[3 * s], keys[3 * s + 1], keys[3 * s + 2]
        w = np.asarray(0.1 * jax.random.normal(kw, (Cin, Co), jnp.float32))
        gamma = np.asarray(jax.random.uniform(kg, (Co,), jnp.float32, 0.5, 1.5))
        beta = np.asarray(0.1 * jax.random.normal(kb, (Co,), jnp.float32))
        scale = gamma / np.sqrt(1.0 + eps)   # BN: running_var=1, running_mean=0
        w_fold = w * scale[None, :]          # fold BN scale into the 1x1 weight
        W_cat[:Cin, s * Co:(s + 1) * Co] = w_fold
        bias_cat[0, s * Co:(s + 1) * Co] = beta

        Ph, Pw = _adaptive_pool_mat(H, b), _adaptive_pool_mat(W, b)
        P = np.einsum('ih,jw->ijhw', Ph, Pw).reshape(b * b, HW)
        Ah, Aw = _bilinear_mat(H, b), _bilinear_mat(W, b)
        U = np.einsum('hi,wj->hwij', Ah, Aw).reshape(HW, b * b)
        P_rows.append(P)
        U_cols.append(U)
        mask[off:off + b * b, s * Co:(s + 1) * Co] = 1.0
        off += b * b

        ref_stage_w.append(jnp.asarray(w_fold))
        ref_stage_b.append(jnp.asarray(beta))
        ref_P.append(jnp.asarray(P))
        ref_U.append(jnp.asarray(U))

    P_all = np.concatenate(P_rows, axis=0)          # (Qt, HW)
    U_all = np.concatenate(U_cols, axis=1)          # (HW, Qt)

    # Per-row-tile, halo'd, spatially zero-padded upsample matrices (R, L, Qt):
    # zero rows at the conv padding positions make the halo's stage channels
    # correct at the image border with no in-kernel masking.
    U_sp = np.zeros((H + 2, Wh, Qt), np.float32)
    U_sp[1:H + 1, 1:W + 1, :] = U_all.reshape(H, W, Qt)
    U_tiles = np.zeros((R, L, Qt), np.float32)
    for r in range(R):
        U_tiles[r, :Hh * Wh, :] = U_sp[r * TR:r * TR + Hh].reshape(Hh * Wh, Qt)

    # Bottleneck 3x3 conv (bias=False) + BN + ReLU; PyTorch cat order is
    # [features | stages].  Weights are split per input-channel group so the
    # halo never has to be materialized as one concatenated tensor.
    kw, kg, kb = keys[-3], keys[-2], keys[-1]
    w4 = np.asarray(0.1 * jax.random.normal(kw, (Co, Cin + S, 3, 3), jnp.float32))
    gamma = np.asarray(jax.random.uniform(kg, (Co,), jnp.float32, 0.5, 1.5))
    beta = np.asarray(0.1 * jax.random.normal(kb, (Co,), jnp.float32))
    scale = gamma / np.sqrt(1.0 + eps)
    w4_fold = w4 * scale[:, None, None, None]        # fold BN scale
    w4_t = np.transpose(w4_fold, (2, 3, 1, 0))       # (ky, kx, ci, co)
    w_s = np.zeros((3, 3, S_p, Co_p), np.float32)
    w_x = np.zeros((3, 3, Cin_p, Co_p), np.float32)
    w_s[:, :, :S, :Co] = w4_t[:, :, Cin:Cin + S, :]  # stage in-channels
    w_x[:, :, :Cin, :Co] = w4_t[:, :, :Cin, :]       # feature in-channels
    bias_b = np.zeros((1, Co_p), np.float32)
    bias_b[0, :Co] = beta

    return dict(
        pool_sizes=tuple(pool_sizes),
        H=H, W=W, TR=TR, R=R, L=L, Qt=Qt,
        Cin=Cin, Cin_p=Cin_p, Co=Co, Co_p=Co_p, S_p=S_p,
        P_all=jnp.asarray(P_all, jnp.bfloat16),
        W_cat=jnp.asarray(W_cat, jnp.bfloat16),
        bias_cat=jnp.asarray(bias_cat, jnp.float32),
        mask=jnp.asarray(mask, jnp.float32),
        U_tiles=jnp.asarray(U_tiles, jnp.bfloat16),
        w_s=jnp.asarray(w_s.reshape(9, S_p, Co_p), jnp.bfloat16),
        w_x=jnp.asarray(w_x.reshape(9, Cin_p, Co_p), jnp.bfloat16),
        bias_b=jnp.asarray(bias_b, jnp.float32),
        ref=dict(stage_w=ref_stage_w, stage_b=ref_stage_b, P=ref_P, U=ref_U,
                 w4=jnp.asarray(w4_fold), b4=jnp.asarray(beta)),
    )


def psp_forward(features_nchw, params):
    """_PSPModule.forward.  Input/output are NCHW like PyTorch."""
    N, C, H, W = features_nchw.shape
    assert (C, H, W) == (params['Cin'], params['H'], params['W'])
    Cin_p, TR, R, L = params['Cin_p'], params['TR'], params['R'], params['L']
    Hh, Wh, HW = TR + 2, W + 2, H * W

    x = jnp.transpose(features_nchw, (0, 2, 3, 1)).astype(jnp.bfloat16)
    if Cin_p > C:
        x = jnp.pad(x, ((0, 0), (0, 0), (0, 0), (0, Cin_p - C)))
    x_flat = x.reshape(N, HW, Cin_p)

    # Pyramid stages: pool -> 1x1 conv (BN scale folded) -> +beta -> ReLU -> mask
    y = _stage_y_call(x_flat, params)                     # (N, Qt, S_p) bf16

    # Halo'd row tiles of the spatially zero-padded features, flattened to the
    # same flat layout as the per-tile upsample matrices (layout plumbing only).
    x_sp = jnp.pad(x, ((0, 0), (1, 1), (1, 1), (0, 0)))   # (N, H+2, W+2, Cin_p)
    tiles = [x_sp[:, r * TR:r * TR + Hh].reshape(N, Hh * Wh, Cin_p)
             for r in range(R)]
    xh = jnp.stack(tiles, axis=1)                         # (N, R, Hh*Wh, Cin_p)
    xh = jnp.pad(xh, ((0, 0), (0, 0), (0, L - Hh * Wh), (0, 0)))

    out = _bottleneck_call(y, params['U_tiles'], xh, params)  # (N, R, TR*Wh, Co_p)
    out = out.reshape(N, R, TR, Wh, params['Co_p'])[:, :, :, :W, :params['Co']]
    out = out.reshape(N, H, W, params['Co'])
    # Dropout2d(0.1): identity in eval mode.
    return jnp.transpose(out, (0, 3, 1, 2))


def psp_reference(features_nchw, params):
    """Pure-jnp f32 re-implementation of the module forward (independent check)."""
    ref = params['ref']
    N, C, H, W = features_nchw.shape
    x = jnp.transpose(features_nchw, (0, 2, 3, 1)).astype(jnp.float32)
    xf = x.reshape(N, H * W, C)
    feats = [x]
    for w, b, P, U in zip(ref['stage_w'], ref['stage_b'], ref['P'], ref['U']):
        pooled = jnp.einsum('qp,npc->nqc', P, xf)
        y = jnp.maximum(jnp.einsum('nqc,cd->nqd', pooled, w) + b, 0.0)
        up = jnp.einsum('pq,nqd->npd', U, y)
        feats.append(up.reshape(N, H, W, -1))
    cat = jnp.concatenate(feats, axis=-1)                   # [features | stages]
    pad = jnp.pad(cat, ((0, 0), (1, 1), (1, 1), (0, 0)))
    w4, b4 = ref['w4'], ref['b4']                           # (Co, Ci, 3, 3), (Co,)
    out = jnp.zeros((N, H, W, w4.shape[0]), jnp.float32)
    for dy in range(3):
        for dx in range(3):
            out = out + jnp.einsum('nhwc,oc->nhwo',
                                   pad[:, dy:dy + H, dx:dx + W, :], w4[:, :, dy, dx])
    out = jnp.maximum(out + b4, 0.0)
    return jnp.transpose(out, (0, 3, 1, 2))


# --------------------------------------------------------------------------

if __name__ == "__main__":
    key = jax.random.PRNGKey(0)
    N, C, H, W = 2, 8, 16, 16
    pool_sizes = (1, 2, 3, 6)

    k_x, k_p = jax.random.split(key)
    x = jax.random.normal(k_x, (N, C, H, W), jnp.float32)
    params = init_params(k_p, C, pool_sizes, H, W)

    out = jax.block_until_ready(psp_forward(x, params))

    Co = C // len(pool_sizes)
    assert out.shape == (N, Co, H, W), out.shape
    assert bool(jnp.all(jnp.isfinite(out)))
    assert bool(jnp.all(out >= 0.0))          # final ReLU

    ref = jax.block_until_ready(psp_reference(x, params))
    max_err = float(jnp.max(jnp.abs(out - ref)))
    assert max_err < 0.1, f"max |kernel - reference| = {max_err}"

    print("KERNEL_OK")
</pallas_src>

<mosaic_0001>
module attributes {stable_mosaic.version = 11 : i64} {
  func.func @_stage_y_kernel(%arg0: i32, %arg1: memref<1x256x128xbf16, #tpu.memory_space<vmem>>, %arg2: memref<50x256xbf16, #tpu.memory_space<vmem>>, %arg3: memref<128x128xbf16, #tpu.memory_space<vmem>>, %arg4: memref<1x128xf32, #tpu.memory_space<vmem>>, %arg5: memref<50x128xf32, #tpu.memory_space<vmem>>, %arg6: memref<1x50x128xbf16, #tpu.memory_space<vmem>>) attributes {dimension_semantics = [#tpu.dimension_semantics<parallel>], iteration_bounds = array<i64: 2>, scalar_prefetch = 0 : i64, scratch_operands = 0 : i64, tpu.core_type = #tpu.core_type<tc>, window_params = [{transform_indices = @transform_0, window_bounds = array<i64: 1, 256, 128>}, {pipeline_mode = #tpu.pipeline_mode<synchronous>, transform_indices = @transform_1, window_bounds = array<i64: 50, 256>}, {pipeline_mode = #tpu.pipeline_mode<synchronous>, transform_indices = @transform_2, window_bounds = array<i64: 128, 128>}, {pipeline_mode = #tpu.pipeline_mode<synchronous>, transform_indices = @transform_3, window_bounds = array<i64: 1, 128>}, {pipeline_mode = #tpu.pipeline_mode<synchronous>, transform_indices = @transform_4, window_bounds = array<i64: 50, 128>}, {transform_indices = @transform_5, window_bounds = array<i64: 1, 50, 128>}]} {
    %c0 = arith.constant 0 : index
    %c0_0 = arith.constant 0 : index
    %0 = vector.load %arg2[%c0, %c0_0] : memref<50x256xbf16, #tpu.memory_space<vmem>>, vector<50x256xbf16>
    %c0_1 = arith.constant 0 : index
    %c0_2 = arith.constant 0 : index
    %c0_3 = arith.constant 0 : index
    %1 = vector.load %arg1[%c0_1, %c0_2, %c0_3] : memref<1x256x128xbf16, #tpu.memory_space<vmem>>, vector<1x256x128xbf16>
    %2 = vector.shape_cast %1 : vector<1x256x128xbf16> to vector<256x128xbf16>
    %cst = arith.constant dense<0.000000e+00> : vector<50x128xf32>
    %3 = tpu.matmul %0, %2, %cst {dimension_numbers = #tpu.dot_dimension_numbers<[1], [0], [0], [1], [0, 0, 1, 1], [], []>} : vector<50x256xbf16>, vector<256x128xbf16>, vector<50x128xf32> -> vector<50x128xf32>
    %4 = arith.truncf %3 : vector<50x128xf32> to vector<50x128xbf16>
    %c0_4 = arith.constant 0 : index
    %c0_5 = arith.constant 0 : index
    %5 = vector.load %arg3[%c0_4, %c0_5] : memref<128x128xbf16, #tpu.memory_space<vmem>>, vector<128x128xbf16>
    %cst_6 = arith.constant dense<0.000000e+00> : vector<50x128xf32>
    %6 = tpu.matmul %4, %5, %cst_6 {dimension_numbers = #tpu.dot_dimension_numbers<[1], [0], [0], [1], [0, 0, 1, 1], [], []>} : vector<50x128xbf16>, vector<128x128xbf16>, vector<50x128xf32> -> vector<50x128xf32>
    %c0_7 = arith.constant 0 : index
    %c0_8 = arith.constant 0 : index
    %7 = vector.load %arg4[%c0_7, %c0_8] : memref<1x128xf32, #tpu.memory_space<vmem>>, vector<1x128xf32>
    %8 = vector.broadcast %7 : vector<1x128xf32> to vector<50x128xf32>
    %9 = arith.addf %6, %8 : vector<50x128xf32>
    %cst_9 = arith.constant 0.000000e+00 : f32
    %10 = vector.broadcast %cst_9 : f32 to vector<50x128xf32>
    %11 = arith.maximumf %9, %10 : vector<50x128xf32>
    %c0_10 = arith.constant 0 : index
    %c0_11 = arith.constant 0 : index
    %12 = vector.load %arg5[%c0_10, %c0_11] : memref<50x128xf32, #tpu.memory_space<vmem>>, vector<50x128xf32>
    %13 = arith.mulf %11, %12 : vector<50x128xf32>
    %14 = arith.truncf %13 : vector<50x128xf32> to vector<50x128xbf16>
    %c0_12 = arith.constant 0 : index
    %c0_13 = arith.constant 0 : index
    %c0_14 = arith.constant 0 : index
    %15 = vector.load %arg6[%c0_12, %c0_13, %c0_14] : memref<1x50x128xbf16, #tpu.memory_space<vmem>>, vector<1x50x128xbf16>
    %16 = vector.shape_cast %15 : vector<1x50x128xbf16> to vector<50x128xbf16>
    %17 = vector.shape_cast %14 : vector<50x128xbf16> to vector<1x50x128xbf16>
    tpu.vector_store %arg6[%c0_12, %c0_13, %c0_14], %17 {strides = array<i32>} : memref<1x50x128xbf16, #tpu.memory_space<vmem>>, vector<1x50x128xbf16>,
    return
  }
  func.func @transform_0(%arg0: i32) -> (i32, i32, i32) {
    %c0_i32 = arith.constant 0 : i32
    %c0_i32_0 = arith.constant 0 : i32
    %c0_i32_1 = arith.constant 0 : i32
    return %arg0, %c0_i32, %c0_i32_0 : i32, i32, i32
  }
  func.func @transform_1(%arg0: i32) -> (i32, i32) {
    %c0_i32 = arith.constant 0 : i32
    %c0_i32_0 = arith.constant 0 : i32
    %c0_i32_1 = arith.constant 0 : i32
    return %c0_i32, %c0_i32_0 : i32, i32
  }
  func.func @transform_2(%arg0: i32) -> (i32, i32) {
    %c0_i32 = arith.constant 0 : i32
    %c0_i32_0 = arith.constant 0 : i32
    %c0_i32_1 = arith.constant 0 : i32
    return %c0_i32, %c0_i32_0 : i32, i32
  }
  func.func @transform_3(%arg0: i32) -> (i32, i32) {
    %c0_i32 = arith.constant 0 : i32
    %c0_i32_0 = arith.constant 0 : i32
    %c0_i32_1 = arith.constant 0 : i32
    return %c0_i32, %c0_i32_0 : i32, i32
  }
  func.func @transform_4(%arg0: i32) -> (i32, i32) {
    %c0_i32 = arith.constant 0 : i32
    %c0_i32_0 = arith.constant 0 : i32
    %c0_i32_1 = arith.constant 0 : i32
    return %c0_i32, %c0_i32_0 : i32, i32
  }
  func.func @transform_5(%arg0: i32) -> (i32, i32, i32) {
    %c0_i32 = arith.constant 0 : i32
    %c0_i32_0 = arith.constant 0 : i32
    %c0_i32_1 = arith.constant 0 : i32
    return %arg0, %c0_i32, %c0_i32_0 : i32, i32, i32
  }
}

</mosaic_0001>

<llo_original>
// kernel: tpu_custom_call.1
$region0: #{tpu_custom_call.1}
  #allocation0 [shape = 'u32[]', space=smem, size = 0x4, offset = 0x4, fixed_abs, tag = 'smem constant byte address 0x4 - core index']
  #allocation1 [shape = 'u32[72,128]{1,0:T(1,128)}', space=vmem, size = 0x9000, scoped, tag = 'internal scratch']
  %s0 = inlined_call_operand.hbm [shape: bf16[2,256,128], index: 0, kind: input, shape index: {}]
  %s1 = inlined_call_operand.hbm [shape: bf16[50,256], index: 1, kind: input, shape index: {}]
  %s2 = inlined_call_operand.hbm [shape: bf16[128,128], index: 2, kind: input, shape index: {}]
  %s3 = inlined_call_operand.vmem [shape: f32[1,128], index: 3, kind: input, shape index: {}]
  %s4 = inlined_call_operand.hbm [shape: f32[50,128], index: 4, kind: input, shape index: {}]
  %s5 = inlined_call_operand.vmem [shape: bf16[2,50,128], index: 5, kind: output, shape index: {}]
  %s6 = sld [smem:[#allocation0]]
  $region69: #{tpu_custom_call.1} parent=0
    _
  %s8 = ssub.s32 1, %s6
  %s9 = scalar_select 0, %s8, %s6
  $region1: #{tpu_custom_call.1} parent=0
    #allocation2 [shape = 'u8[131072]{0}', space=vmem, size = 0x20000, scoped, tag = 'input window, operand 0']
    #allocation3 [shape = 's32[2]{0}', space=sflag, size = 0x8, scoped, tag = 'scoped memory for tpu_custom_call.1']
    #allocation4 [shape = 'u8[28672]{0}', space=vmem, size = 0x7000, scoped, tag = 'input window, operand 1, single buffered']
    #allocation5 [shape = 's32[1]{0}', space=sflag, size = 0x4, scoped, tag = 'scoped memory for tpu_custom_call.1']
    #allocation6 [shape = 'u8[32768]{0}', space=vmem, size = 0x8000, scoped, tag = 'input window, operand 2, single buffered']
    #allocation7 [shape = 'u8[28672]{0}', space=vmem, size = 0x7000, scoped, tag = 'input window, operand 4, single buffered']
    #allocation8 [shape = 's32[1]{0}', space=sflag, size = 0x4, scoped, tag = 'scoped memory for tpu_custom_call.1']
    %10 = vsyncpa [#allocation3], 0
    %s11 = scalar_lea.sflag [#allocation3], 1
    %12 = vsyncpa %s11, 0
    %13 = vsyncpa [#allocation5], 0
    %14 = vsyncpa [#allocation8], 0
    loop: start=0, step=1, limit=4
    $region2: #{tpu_custom_call.1} parent=1 // loop_pre_header
      _
    $region3: #{tpu_custom_call.1} parent=1 // loop_header
      %s16 = sphi 0, %s20
      %p17 = scmp.ge.s32.totalorder %s16, 4
      %s26 = sphi 0, %s28
      %s29 = sphi 0, %s26
      %s30 = sphi 0, %s29
      %s46 = sphi 0, %s30
      %s50 = sphi 0, %s50
      %s52 = sphi 0, %s50
      %s53 = sphi 0, %s52
      %s67 = sphi 0, %s53
      %s71 = sphi 0, %s71
      %s73 = sphi 0, %s71
      %s74 = sphi 0, %s73
      %s88 = sphi 0, %s74
      %s92 = sphi 0, %s92
      %s94 = sphi 0, %s92
      %s95 = sphi 0, %s94
      %s109 = sphi 0, %s95
      %s113 = sphi 0, %s113
      %s115 = sphi 0, %s113
      %s116 = sphi 0, %s115
      %s130 = sphi 0, %s116
      %s136 = sphi 0, %s138
      %s139 = sphi 0, %s136
      %s140 = sphi 0, %s139
      %s156 = sphi 0, %s140
    $region4: #{tpu_custom_call.1} parent=1 // loop_header_branch
      %19 = sbr.rel (%p17) target = $region8
    $region5: #{tpu_custom_call.1} parent=1 // loop_body
      %s21 = ssub.s32 %s16, 1
      %s22 = ssub.s32 %s16, 2
      %s23 = sadd.s32 %s16, 1
      %s24 = ssub.s32 %s16, %s23
      %p25 = scmp.eq.s32.totalorder %s24, 0
      %s27 = sadd.s32 %s26, 1
      %s28 = scalar_select %p25, %s26, %s27
      %p31 = pneg %p25
      %p32 = scmp.eq.s32.totalorder %s16, 1
      %p33 = por %p31, %p32
      %p34 = scmp.ne.s32.totalorder %s26, %s29
      %p35 = scmp.eq.s32.totalorder %s16, 0
      %p36 = por %p34, %p35
      %p37 = scmp.ne.s32.totalorder %s26, %s29
      %p38 = scmp.eq.s32.totalorder %s21, 1
      %p39 = por %p37, %p38
      %p40 = scmp.ne.s32.totalorder %s29, %s30
      %p41 = scmp.eq.s32.totalorder %s21, 0
      %p42 = por %p40, %p41
      %p43 = scmp.ne.s32.totalorder %s29, %s30
      %p44 = scmp.eq.s32.totalorder %s22, 1
      %p45 = por %p43, %p44
      %p47 = scmp.ne.s32.totalorder %s30, %s46
      %p48 = scmp.eq.s32.totalorder %s22, 0
      %p49 = por %p47, %p48
      %s51 = sadd.s32 %s50, 1
      %p54 = scmp.eq.s32.totalorder %s16, 1
      %p55 = scmp.ne.s32.totalorder %s50, %s52
      %p56 = scmp.eq.s32.totalorder %s16, 0
      %p57 = por %p55, %p56
      %p58 = scmp.ne.s32.totalorder %s50, %s52
      %p59 = scmp.eq.s32.totalorder %s21, 1
      %p60 = por %p58, %p59
      %p61 = scmp.ne.s32.totalorder %s52, %s53
      %p62 = scmp.eq.s32.totalorder %s21, 0
      %p63 = por %p61, %p62
      %p64 = scmp.ne.s32.totalorder %s52, %s53
      %p65 = scmp.eq.s32.totalorder %s22, 1
      %p66 = por %p64, %p65
      %p68 = scmp.ne.s32.totalorder %s53, %s67
      %p69 = scmp.eq.s32.totalorder %s22, 0
      %p70 = por %p68, %p69
      %s72 = sadd.s32 %s71, 1
      %p75 = scmp.eq.s32.totalorder %s16, 1
      %p76 = scmp.ne.s32.totalorder %s71, %s73
      %p77 = scmp.eq.s32.totalorder %s16, 0
      %p78 = por %p76, %p77
      %p79 = scmp.ne.s32.totalorder %s71, %s73
      %p80 = scmp.eq.s32.totalorder %s21, 1
      %p81 = por %p79, %p80
      %p82 = scmp.ne.s32.totalorder %s73, %s74
      %p83 = scmp.eq.s32.totalorder %s21, 0
      %p84 = por %p82, %p83
      %p85 = scmp.ne.s32.totalorder %s73, %s74
      %p86 = scmp.eq.s32.totalorder %s22, 1
      %p87 = por %p85, %p86
      %p89 = scmp.ne.s32.totalorder %s74, %s88
      %p90 = scmp.eq.s32.totalorder %s22, 0
      %p91 = por %p89, %p90
      %s93 = sadd.s32 %s92, 1
      %p96 = scmp.eq.s32.totalorder %s16, 1
      %p97 = scmp.ne.s32.totalorder %s92, %s94
      %p98 = scmp.eq.s32.totalorder %s16, 0
      %p99 = por %p97, %p98
      %p100 = scmp.ne.s32.totalorder %s92, %s94
      %p101 = scmp.eq.s32.totalorder %s21, 1
      %p102 = por %p100, %p101
      %p103 = scmp.ne.s32.totalorder %s94, %s95
      %p104 = scmp.eq.s32.totalorder %s21, 0
      %p105 = por %p103, %p104
      %p106 = scmp.ne.s32.totalorder %s94, %s95
      %p107 = scmp.eq.s32.totalorder %s22, 1
      %p108 = por %p106, %p107
      %p110 = scmp.ne.s32.totalorder %s95, %s109
      %p111 = scmp.eq.s32.totalorder %s22, 0
      %p112 = por %p110, %p111
      %s114 = sadd.s32 %s113, 1
      %p117 = scmp.eq.s32.totalorder %s16, 1
      %p118 = scmp.ne.s32.totalorder %s113, %s115
      %p119 = scmp.eq.s32.totalorder %s16, 0
      %p120 = por %p118, %p119
      %p121 = scmp.ne.s32.totalorder %s113, %s115
      %p122 = scmp.eq.s32.totalorder %s21, 1
      %p123 = por %p121, %p122
      %p124 = scmp.ne.s32.totalorder %s115, %s116
      %p125 = scmp.eq.s32.totalorder %s21, 0
      %p126 = por %p124, %p125
      %p127 = scmp.ne.s32.totalorder %s115, %s116
      %p128 = scmp.eq.s32.totalorder %s22, 1
      %p129 = por %p127, %p128
      %p131 = scmp.ne.s32.totalorder %s116, %s130
      %p132 = scmp.eq.s32.totalorder %s22, 0
      %p133 = por %p131, %p132
      %s134 = ssub.s32 %s16, %s23
      %p135 = scmp.eq.s32.totalorder %s134, 0
      %s137 = sadd.s32 %s136, 1
      %s138 = scalar_select %p135, %s136, %s137
      %p141 = pneg %p135
      %p142 = scmp.eq.s32.totalorder %s16, 1
      %p143 = por %p141, %p142
      %p144 = scmp.ne.s32.totalorder %s136, %s139
      %p145 = scmp.eq.s32.totalorder %s16, 0
      %p146 = por %p144, %p145
      %p147 = scmp.ne.s32.totalorder %s136, %s139
      %p148 = scmp.eq.s32.totalorder %s21, 1
      %p149 = por %p147, %p148
      %p150 = scmp.ne.s32.totalorder %s139, %s140
      %p151 = scmp.eq.s32.totalorder %s21, 0
      %p152 = por %p150, %p151
      %p153 = scmp.ne.s32.totalorder %s139, %s140
      %p154 = scmp.eq.s32.totalorder %s22, 1
      %p155 = por %p153, %p154
      %p157 = scmp.ne.s32.totalorder %s140, %s156
      %p158 = scmp.eq.s32.totalorder %s22, 0
      %p159 = por %p157, %p158
      %p160 = scmp.le.s32.totalorder 1, %s16
      %p161 = scmp.lt.s32.totalorder %s16, 3
      %p162 = pnand %p160, %p161
      %p163 = pneg %p162
      // Predicated region
      $region9: #{tpu_custom_call.1} parent=5 // pred_check
        _
      $region10: #{tpu_custom_call.1} parent=5 // pred_check_branch
        %165 = sbr.rel (%p162) target = $region12
      $region11: #{tpu_custom_call.1} parent=5 // pred_region
        %s166 = ssub.s32 %s16, 1
        // Predicated region
        $region13: #{tpu_custom_call.1} parent=11 // pred_check
          %p167 = pneg %p63
        $region14: #{tpu_custom_call.1} parent=11 // pred_check_branch
          %169 = sbr.rel (%p167) target = $region16
        $region15: #{tpu_custom_call.1} parent=11 // pred_region
          %171 = vsyncadd [#allocation5], 0
          %s172 = sshll.u32 %s1, 4
          %s173 = int_to_ptr.hbm [resolvable:$true] %s172
          %s174 = sshll.u32 [#allocation4], 4
          %s175 = int_to_ptr.vmem [resolvable:$true] %s174
          %180 = dma.hbm_to_vmem [thread:$0]  %s173, 896, %s175, [#allocation5], 128, 128, 8
        $region16: #{tpu_custom_call.1} parent=11 // pred_fallthru
          _
        // Predicated region
        $region17: #{tpu_custom_call.1} parent=11 // pred_check
          %p181 = pneg %p84
        $region18: #{tpu_custom_call.1} parent=11 // pred_check_branch
          %183 = sbr.rel (%p181) target = $region20
        $region19: #{tpu_custom_call.1} parent=11 // pred_region
          %185 = vsyncadd [#allocation5], 0
          %s186 = sshll.u32 %s2, 4
          %s187 = int_to_ptr.hbm [resolvable:$true] %s186
          %s188 = sshll.u32 [#allocation6], 4
          %s189 = int_to_ptr.vmem [resolvable:$true] %s188
          %194 = dma.hbm_to_vmem [thread:$0]  %s187, 1024, %s189, [#allocation5], 64, 64, 4
        $region20: #{tpu_custom_call.1} parent=11 // pred_fallthru
          _
        // Predicated region
        $region21: #{tpu_custom_call.1} parent=11 // pred_check
          %p195 = pneg %p105
        $region22: #{tpu_custom_call.1} parent=11 // pred_check_branch
          %197 = sbr.rel (%p195) target = $region24
        $region23: #{tpu_custom_call.1} parent=11 // pred_region
          _
        $region24: #{tpu_custom_call.1} parent=11 // pred_fallthru
          _
        // Predicated region
        $region25: #{tpu_custom_call.1} parent=11 // pred_check
          %p198 = pneg %p126
        $region26: #{tpu_custom_call.1} parent=11 // pred_check_branch
          %200 = sbr.rel (%p198) target = $region28
        $region27: #{tpu_custom_call.1} parent=11 // pred_region
          %202 = vsyncadd [#allocation8], 0
          %s203 = sshll.u32 %s4, 4
          %s204 = int_to_ptr.hbm [resolvable:$true] %s203
          %s205 = sshll.u32 [#allocation7], 4
          %s206 = int_to_ptr.vmem [resolvable:$true] %s205
          %211 = dma.hbm_to_vmem [thread:$0]  %s204, 896, %s206, [#allocation8], 128, 128, 8
        $region28: #{tpu_custom_call.1} parent=11 // pred_fallthru
          _
      $region12: #{tpu_custom_call.1} parent=5 // pred_fallthru
        _
      %p212 = scmp.lt.s32.totalorder %s16, 2
      // Predicated region
      $region29: #{tpu_custom_call.1} parent=5 // pred_check
        %p213 = pneg %p212
      $region30: #{tpu_custom_call.1} parent=5 // pred_check_branch
        %215 = sbr.rel (%p213) target = $region32
      $region31: #{tpu_custom_call.1} parent=5 // pred_region
        // Predicated region
        $region33: #{tpu_custom_call.1} parent=31 // pred_check
          %p216 = pneg %p36
        $region34: #{tpu_custom_call.1} parent=31 // pred_check_branch
          %218 = sbr.rel (%p216) target = $region36
        $region35: #{tpu_custom_call.1} parent=31 // pred_region
          %s219 = sand.u32 %s26, 1
          %s220 = scalar_lea.sflag [#allocation3], %s219
          %s221 = sand.u32 %s26, 1
          %s222 = smul.addr %s221, 128
          %s223 = scalar_lea.vmem [#allocation2], %s222
          %225 = vsyncadd %s220, 0
          %s226 = smul.addr %s16, 32
          %s227 = smul.addr %s226, 4
          %s228 = scalar_lea.hbm %s0, %s227
          %s229 = sshll.u32 %s228, 4
          %s230 = int_to_ptr.hbm [resolvable:$true] %s229
          %s231 = sshll.u32 %s223, 4
          %s232 = int_to_ptr.vmem [resolvable:$true] %s231
          %237 = dma.hbm_to_vmem [thread:$0]  %s230, 2048, %s232, %s220, 64, 64, 4
        $region36: #{tpu_custom_call.1} parent=31 // pred_fallthru
          _
      $region32: #{tpu_custom_call.1} parent=5 // pred_fallthru
        _
      %p238 = scmp.le.s32.totalorder 1, %s16
      %p239 = scmp.lt.s32.totalorder %s16, 3
      %p240 = pnand %p238, %p239
      %p241 = pneg %p240
      // Predicated region
      $region37: #{tpu_custom_call.1} parent=5 // pred_check
        _
      $region38: #{tpu_custom_call.1} parent=5 // pred_check_branch
        %243 = sbr.rel (%p240) target = $region40
      $region39: #{tpu_custom_call.1} parent=5 // pred_region
        %s244 = ssub.s32 %s16, 1
        %s245 = sand.u32 %s29, 1
        %s246 = scalar_lea.sflag [#allocation3], %s245
        %s247 = sand.u32 %s29, 1
        %s248 = smul.addr %s247, 128
        %s249 = scalar_lea.vmem [#allocation2], %s248
        // Predicated region
        $region41: #{tpu_custom_call.1} parent=39 // pred_check
          %p250 = pneg %p42
        $region42: #{tpu_custom_call.1} parent=39 // pred_check_branch
          %252 = sbr.rel (%p250) target = $region44
        $region43: #{tpu_custom_call.1} parent=39 // pred_region
          %254 = dma.done %s246, 2048
        $region44: #{tpu_custom_call.1} parent=39 // pred_fallthru
          _
        // Predicated region
        $region45: #{tpu_custom_call.1} parent=39 // pred_check
          %p255 = pneg %p63
        $region46: #{tpu_custom_call.1} parent=39 // pred_check_branch
          %257 = sbr.rel (%p255) target = $region48
        $region47: #{tpu_custom_call.1} parent=39 // pred_region
          %259 = dma.done [#allocation5], 896
        $region48: #{tpu_custom_call.1} parent=39 // pred_fallthru
          _
        // Predicated region
        $region49: #{tpu_custom_call.1} parent=39 // pred_check
          %p260 = pneg %p84
        $region50: #{tpu_custom_call.1} parent=39 // pred_check_branch
          %262 = sbr.rel (%p260) target = $region52
        $region51: #{tpu_custom_call.1} parent=39 // pred_region
          %264 = dma.done [#allocation5], 1024
        $region52: #{tpu_custom_call.1} parent=39 // pred_fallthru
          _
        // Predicated region
        $region53: #{tpu_custom_call.1} parent=39 // pred_check
          %p265 = pneg %p126
        $region54: #{tpu_custom_call.1} parent=39 // pred_check_branch
          %267 = sbr.rel (%p265) target = $region56
        $region55: #{tpu_custom_call.1} parent=39 // pred_region
          %269 = dma.done [#allocation8], 896
        $region56: #{tpu_custom_call.1} parent=39 // pred_fallthru
          _
        %s270 = sand.u32 %s29, 1
        %s271 = scalar_lea.sflag [#allocation3], %s270
        %s272 = sand.u32 %s29, 1
        %s273 = smul.addr %s272, 128
        %s274 = scalar_lea.vmem [#allocation2], %s273
        %p275 = pneg %p42
        %p276 = pneg %p39
        %p277 = pneg %p63
        %p278 = pneg %p60
        %p279 = pneg %p84
        %p280 = pneg %p81
        %p281 = pneg %p105
        %p282 = pneg %p102
        %p283 = pneg %p126
        %p284 = pneg %p123
        %p285 = pneg %p152
        %p286 = pneg %p149
        %p287 = scmp.lt.s32.totalorder %s21, 1
        %s288 = scalar_select %p287, %s21, 1
        %s289 = smul.addr %s288, 7
        %s290 = smul.addr %s289, 4
        %s291 = scalar_lea.vmem %s5, %s290
        %p292 = scmp.lt.s32.totalorder %s21, 1
        %s293 = scalar_select %p292, %s21, 1
        %s294 = smul.addr %s293, 7
        %s295 = smul.addr %s294, 4
        %s296 = scalar_lea.vmem %s5, %s295
        %v297 = vld [vmem:[#allocation4] sm:$0xff]
        %v298 = vld [vmem:[#allocation4 + $0x8] sm:$0xff]
        %v299 = vld [vmem:[#allocation4 + $0x10] sm:$0xff]
        %v300 = vld [vmem:[#allocation4 + $0x18] sm:$0xff]
        %v301 = vld [vmem:[#allocation4 + $0x20] sm:$0xff]
        %v302 = vld [vmem:[#allocation4 + $0x28] sm:$0xff]
        %v303 = vld [vmem:[#allocation4 + $0x30] sm:$0x11]
        %v304 = vld [vmem:[%s249] sm:$0xf]
        %v305 = vld [vmem:[%s249 + $0x4] sm:$0xf]
        %v306 = vld [vmem:[%s249 + $0x8] sm:$0xf]
        %v307 = vld [vmem:[%s249 + $0xc] sm:$0xf]
        %v308 = vld [vmem:[%s249 + $0x10] sm:$0xf]
        %v309 = vld [vmem:[%s249 + $0x14] sm:$0xf]
        %v310 = vld [vmem:[%s249 + $0x18] sm:$0xf]
        %v311 = vld [vmem:[%s249 + $0x1c] sm:$0xf]
        %v312 = vld [vmem:[%s249 + $0x20] sm:$0xf]
        %v313 = vld [vmem:[%s249 + $0x24] sm:$0xf]
        %v314 = vld [vmem:[%s249 + $0x28] sm:$0xf]
        %v315 = vld [vmem:[%s249 + $0x2c] sm:$0xf]
        %v316 = vld [vmem:[%s249 + $0x30] sm:$0xf]
        %v317 = vld [vmem:[%s249 + $0x34] sm:$0xf]
        %v318 = vld [vmem:[%s249 + $0x38] sm:$0xf]
        %v319 = vld [vmem:[%s249 + $0x3c] sm:$0xf]
        %v320 = vld [vmem:[%s249 + $0x40] sm:$0xf]
        %v321 = vld [vmem:[%s249 + $0x44] sm:$0xf]
        %v322 = vld [vmem:[%s249 + $0x48] sm:$0xf]
        %v323 = vld [vmem:[%s249 + $0x4c] sm:$0xf]
        %v324 = vld [vmem:[%s249 + $0x50] sm:$0xf]
        %v325 = vld [vmem:[%s249 + $0x54] sm:$0xf]
        %v326 = vld [vmem:[%s249 + $0x58] sm:$0xf]
        %v327 = vld [vmem:[%s249 + $0x5c] sm:$0xf]
        %v328 = vld [vmem:[%s249 + $0x60] sm:$0xf]
        %v329 = vld [vmem:[%s249 + $0x64] sm:$0xf]
        %v330 = vld [vmem:[%s249 + $0x68] sm:$0xf]
        %v331 = vld [vmem:[%s249 + $0x6c] sm:$0xf]
        %v332 = vld [vmem:[%s249 + $0x70] sm:$0xf]
        %v333 = vld [vmem:[%s249 + $0x74] sm:$0xf]
        %v334 = vld [vmem:[%s249 + $0x78] sm:$0xf]
        %v335 = vld [vmem:[%s249 + $0x7c] sm:$0xf]
        %v343 = vunpack.c.l.b16 %v297
        %v344 = vunpack.c.h.b16 %v297
        %v345 = vunpack.c.l.b16 %v298
        %v346 = vunpack.c.h.b16 %v298
        %v347 = vunpack.c.l.b16 %v299
        %v348 = vunpack.c.h.b16 %v299
        %v349 = vunpack.c.l.b16 %v300
        %v350 = vunpack.c.h.b16 %v300
        %v351 = vunpack.c.l.b16 %v301
        %v352 = vunpack.c.h.b16 %v301
        %v353 = vunpack.c.l.b16 %v302
        %v354 = vunpack.c.h.b16 %v302
        %v355 = vunpack.c.l.b16 %v303
        %v356 = vunpack.c.h.b16 %v303
        %v357 = vpack.c.b16 %v345, %v343
        %v358 = vpack.c.b16 %v346, %v344
        %v359 = vpack.c.b16 %v349, %v347
        %v360 = vpack.c.b16 %v350, %v348
        %v361 = vpack.c.b16 %v353, %v351
        %v362 = vpack.c.b16 %v354, %v352
        %v363 = vpack.c.b16 %v355, %v355
        %v364 = vpack.c.b16 %v356, %v356
        %v405 = vunpack.c.l.b16 %v304
        %v406 = vunpack.c.l.b16 %v305
        %v407 = vunpack.c.l.b16 %v306
        %v408 = vunpack.c.l.b16 %v307
        %v409 = vunpack.c.l.b16 %v308
        %v410 = vunpack.c.l.b16 %v309
        %v411 = vunpack.c.l.b16 %v310
        %v412 = vunpack.c.l.b16 %v311
        %v413 = vunpack.c.l.b16 %v312
        %v414 = vunpack.c.l.b16 %v313
        %v415 = vunpack.c.l.b16 %v314
        %v416 = vunpack.c.l.b16 %v315
        %v417 = vunpack.c.l.b16 %v316
        %v418 = vunpack.c.l.b16 %v317
        %v419 = vunpack.c.l.b16 %v318
        %v420 = vunpack.c.l.b16 %v319
        %v421 = vunpack.c.l.b16 %v320
        %v422 = vunpack.c.l.b16 %v321
        %v423 = vunpack.c.l.b16 %v322
        %v424 = vunpack.c.l.b16 %v323
        %v425 = vunpack.c.l.b16 %v324
        %v426 = vunpack.c.l.b16 %v325
        %v427 = vunpack.c.l.b16 %v326
        %v428 = vunpack.c.l.b16 %v327
        %v429 = vunpack.c.l.b16 %v328
        %v430 = vunpack.c.l.b16 %v329
        %v431 = vunpack.c.l.b16 %v330
        %v432 = vunpack.c.l.b16 %v331
        %v433 = vunpack.c.l.b16 %v332
        %v434 = vunpack.c.l.b16 %v333
        %v435 = vunpack.c.l.b16 %v334
        %v436 = vunpack.c.l.b16 %v335
        %v437 = vpack.c.b16 %v406, %v405
        %v438 = vpack.c.b16 %v408, %v407
        %v439 = vpack.c.b16 %v410, %v409
        %v440 = vpack.c.b16 %v412, %v411
        %v441 = vpack.c.b16 %v414, %v413
        %v442 = vpack.c.b16 %v416, %v415
        %v443 = vpack.c.b16 %v418, %v417
        %v444 = vpack.c.b16 %v420, %v419
        %v445 = vpack.c.b16 %v422, %v421
        %v446 = vpack.c.b16 %v424, %v423
        %v447 = vpack.c.b16 %v426, %v425
        %v448 = vpack.c.b16 %v428, %v427
        %v449 = vpack.c.b16 %v430, %v429
        %v450 = vpack.c.b16 %v432, %v431
        %v451 = vpack.c.b16 %v434, %v433
        %v452 = vpack.c.b16 %v436, %v435
        %469 = vmatpush.bf16.msra.mxu0 %v444
        %470 = vmatpush.bf16.msra.mxu0 %v443
        %471 = vmatpush.bf16.msra.mxu0 %v442
        %472 = vmatpush.bf16.msra.mxu0 %v441
        %473 = vmatpush.bf16.msra.mxu0 %v440
        %474 = vmatpush.bf16.msra.mxu0 %v439
        %475 = vmatpush.bf16.msra.mxu0 %v438
        %476 = vmatpush.bf16.msra.mxu0 %v437
        %477 = vmatmul.bf16.gmra.mxu0 %v357
        %v478 = vpop.f32.mrf.mxu0
        %v479 = vadd.f32 0.0, %v478
        %v480 = vpop.f32.mrf.mxu0
        %v481 = vadd.f32 0.0, %v480
        %482 = vmatmul.bf16.gmra.mxu0 %v359
        %v483 = vpop.f32.mrf.mxu0
        %v484 = vadd.f32 0.0, %v483
        %v485 = vpop.f32.mrf.mxu0
        %v486 = vadd.f32 0.0, %v485
        %487 = vmatmul.bf16.gmra.mxu0 %v361
        %v488 = vpop.f32.mrf.mxu0
        %v489 = vadd.f32 0.0, %v488
        %v490 = vpop.f32.mrf.mxu0
        %v491 = vadd.f32 0.0, %v490
        %492 = vmatmul.bf16.gmra.mxu0 %v363
        %v493 = vpop.f32.mrf.mxu0
        %v494 = vadd.f32 0.0, %v493
        %v495 = vpop.f32.mrf.mxu0
        %496 = vdwg.mxu0
        %497 = vmatpush.bf16.msra.mxu0 %v452
        %498 = vmatpush.bf16.msra.mxu0 %v451
        %499 = vmatpush.bf16.msra.mxu0 %v450
        %500 = vmatpush.bf16.msra.mxu0 %v449
        %501 = vmatpush.bf16.msra.mxu0 %v448
        %502 = vmatpush.bf16.msra.mxu0 %v447
        %503 = vmatpush.bf16.msra.mxu0 %v446
        %504 = vmatpush.bf16.msra.mxu0 %v445
        %505 = vmatmul.bf16.gmra.mxu0 %v358
        %v506 = vpop.f32.mrf.mxu0
        %v507 = vadd.f32 %v479, %v506
        %v508 = vpop.f32.mrf.mxu0
        %v509 = vadd.f32 %v481, %v508
        %510 = vmatmul.bf16.gmra.mxu0 %v360
        %v511 = vpop.f32.mrf.mxu0
        %v512 = vadd.f32 %v484, %v511
        %v513 = vpop.f32.mrf.mxu0
        %v514 = vadd.f32 %v486, %v513
        %515 = vmatmul.bf16.gmra.mxu0 %v362
        %v516 = vpop.f32.mrf.mxu0
        %v517 = vadd.f32 %v489, %v516
        %v518 = vpop.f32.mrf.mxu0
        %v519 = vadd.f32 %v491, %v518
        %520 = vmatmul.bf16.gmra.mxu0 %v364
        %v521 = vpop.f32.mrf.mxu0
        %v522 = vadd.f32 %v494, %v521
        %v523 = vpop.f32.mrf.mxu0
        %524 = vdwg.mxu0
        %v525 = vpack.c.bf16 %v509, %v507
        %v526 = vpack.c.bf16 %v514, %v512
        %v527 = vpack.c.bf16 %v519, %v517
        %v528 = vpack.c.bf16 %v522, %v522
        %v529 = vld [vmem:[#allocation6] sm:$0xf]
        %v530 = vld [vmem:[#allocation6 + $0x4] sm:$0xf]
        %v531 = vld [vmem:[#allocation6 + $0x8] sm:$0xf]
        %v532 = vld [vmem:[#allocation6 + $0xc] sm:$0xf]
        %v533 = vld [vmem:[#allocation6 + $0x10] sm:$0xf]
        %v534 = vld [vmem:[#allocation6 + $0x14] sm:$0xf]
        %v535 = vld [vmem:[#allocation6 + $0x18] sm:$0xf]
        %v536 = vld [vmem:[#allocation6 + $0x1c] sm:$0xf]
        %v537 = vld [vmem:[#allocation6 + $0x20] sm:$0xf]
        %v538 = vld [vmem:[#allocation6 + $0x24] sm:$0xf]
        %v539 = vld [vmem:[#allocation6 + $0x28] sm:$0xf]
        %v540 = vld [vmem:[#allocation6 + $0x2c] sm:$0xf]
        %v541 = vld [vmem:[#allocation6 + $0x30] sm:$0xf]
        %v542 = vld [vmem:[#allocation6 + $0x34] sm:$0xf]
        %v543 = vld [vmem:[#allocation6 + $0x38] sm:$0xf]
        %v544 = vld [vmem:[#allocation6 + $0x3c] sm:$0xf]
        %v545 = vld [vmem:[%s3] sm:$0x1]
        %v547 = vperm.slane %v545, 0
        %v565 = vunpack.c.l.b16 %v529
        %v566 = vunpack.c.l.b16 %v530
        %v567 = vunpack.c.l.b16 %v531
        %v568 = vunpack.c.l.b16 %v532
        %v569 = vunpack.c.l.b16 %v533
        %v570 = vunpack.c.l.b16 %v534
        %v571 = vunpack.c.l.b16 %v535
        %v572 = vunpack.c.l.b16 %v536
        %v573 = vunpack.c.l.b16 %v537
        %v574 = vunpack.c.l.b16 %v538
        %v575 = vunpack.c.l.b16 %v539
        %v576 = vunpack.c.l.b16 %v540
        %v577 = vunpack.c.l.b16 %v541
        %v578 = vunpack.c.l.b16 %v542
        %v579 = vunpack.c.l.b16 %v543
        %v580 = vunpack.c.l.b16 %v544
        %v581 = vpack.c.b16 %v566, %v565
        %v582 = vpack.c.b16 %v568, %v567
        %v583 = vpack.c.b16 %v570, %v569
        %v584 = vpack.c.b16 %v572, %v571
        %v585 = vpack.c.b16 %v574, %v573
        %v586 = vpack.c.b16 %v576, %v575
        %v587 = vpack.c.b16 %v578, %v577
        %v588 = vpack.c.b16 %v580, %v579
        %597 = vmatpush.bf16.msra.mxu0 %v588
        %598 = vmatpush.bf16.msra.mxu0 %v587
        %599 = vmatpush.bf16.msra.mxu0 %v586
        %600 = vmatpush.bf16.msra.mxu0 %v585
        %601 = vmatpush.bf16.msra.mxu0 %v584
        %602 = vmatpush.bf16.msra.mxu0 %v583
        %603 = vmatpush.bf16.msra.mxu0 %v582
        %604 = vmatpush.bf16.msra.mxu0 %v581
        %605 = vmatmul.bf16.gmra.mxu0 %v525
        %v606 = vpop.f32.mrf.mxu0
        %v607 = vadd.f32 %v547, %v606
        %v608 = vpop.f32.mrf.mxu0
        %v609 = vadd.f32 %v547, %v608
        %610 = vmatmul.bf16.gmra.mxu0 %v526
        %v611 = vpop.f32.mrf.mxu0
        %v612 = vadd.f32 %v547, %v611
        %v613 = vpop.f32.mrf.mxu0
        %v614 = vadd.f32 %v547, %v613
        %615 = vmatmul.bf16.gmra.mxu0 %v527
        %v616 = vpop.f32.mrf.mxu0
        %v617 = vadd.f32 %v547, %v616
        %v618 = vpop.f32.mrf.mxu0
        %v619 = vadd.f32 %v547, %v618
        %620 = vmatmul.bf16.gmra.mxu0 %v528
        %v621 = vpop.f32.mrf.mxu0
        %v622 = vadd.f32 %v547, %v621
        %v623 = vpop.f32.mrf.mxu0
        %624 = vdwg.mxu0
        %v625 = vmax.f32 %v607, 0.0
        %v626 = vmax.f32 %v609, 0.0
        %v627 = vmax.f32 %v612, 0.0
        %v628 = vmax.f32 %v614, 0.0
        %v629 = vmax.f32 %v617, 0.0
        %v630 = vmax.f32 %v619, 0.0
        %v631 = vmax.f32 %v622, 0.0
        %v632 = vld [vmem:[#allocation7] sm:$0xff]
        %v633 = vld [vmem:[#allocation7 + $0x8] sm:$0xff]
        %v634 = vld [vmem:[#allocation7 + $0x10] sm:$0xff]
        %v635 = vld [vmem:[#allocation7 + $0x18] sm:$0xff]
        %v636 = vld [vmem:[#allocation7 + $0x20] sm:$0xff]
        %v637 = vld [vmem:[#allocation7 + $0x28] sm:$0xff]
        %v638 = vld [vmem:[#allocation7 + $0x30] sm:$0x3]
        %v639 = vmul.f32 %v625, %v632
        %v640 = vmul.f32 %v626, %v633
        %v641 = vmul.f32 %v627, %v634
        %v642 = vmul.f32 %v628, %v635
        %v643 = vmul.f32 %v629, %v636
        %v644 = vmul.f32 %v630, %v637
        %v645 = vmul.f32 %v631, %v638
        %v646 = vpack.c.bf16 %v639, %v639
        %v647 = vpack.c.bf16 %v640, %v640
        %v648 = vpack.c.bf16 %v641, %v641
        %v649 = vpack.c.bf16 %v642, %v642
        %v650 = vpack.c.bf16 %v643, %v643
        %v651 = vpack.c.bf16 %v644, %v644
        %v652 = vpack.c.bf16 %v645, %v645
        %653 = vst [vmem:[%s296] sm:$0xf] %v646
        %654 = vst [vmem:[%s296 + $0x4] sm:$0xf] %v647
        %655 = vst [vmem:[%s296 + $0x8] sm:$0xf] %v648
        %656 = vst [vmem:[%s296 + $0xc] sm:$0xf] %v649
        %657 = vst [vmem:[%s296 + $0x10] sm:$0xf] %v650
        %658 = vst [vmem:[%s296 + $0x14] sm:$0xf] %v651
        %659 = vst [vmem:[%s296 + $0x18] sm:$0x1] %v652
        %p660 = scmp.lt.s32.totalorder %s21, 1
        %s661 = scalar_select %p660, %s21, 1
        %s662 = smul.addr %s661, 7
        %s663 = smul.addr %s662, 4
        %s664 = scalar_lea.vmem %s5, %s663
        // Predicated region
        $region57: #{tpu_custom_call.1} parent=39 // pred_check
          %p665 = pneg %p149
        $region58: #{tpu_custom_call.1} parent=39 // pred_check_branch
          %667 = sbr.rel (%p665) target = $region60
        $region59: #{tpu_custom_call.1} parent=39 // pred_region
          _
        $region60: #{tpu_custom_call.1} parent=39 // pred_fallthru
          _
      $region40: #{tpu_custom_call.1} parent=5 // pred_fallthru
        _
      %p668 = scmp.le.s32.totalorder 2, %s16
      // Predicated region
      $region61: #{tpu_custom_call.1} parent=5 // pred_check
        %p669 = pneg %p668
      $region62: #{tpu_custom_call.1} parent=5 // pred_check_branch
        %671 = sbr.rel (%p669) target = $region64
      $region63: #{tpu_custom_call.1} parent=5 // pred_region
        %s672 = ssub.s32 %s16, 2
        // Predicated region
        $region65: #{tpu_custom_call.1} parent=63 // pred_check
          %p673 = pneg %p155
        $region66: #{tpu_custom_call.1} parent=63 // pred_check_branch
          %675 = sbr.rel (%p673) target = $region68
        $region67: #{tpu_custom_call.1} parent=63 // pred_region
          %p676 = scmp.lt.s32.totalorder %s22, 1
          %s677 = scalar_select %p676, %s22, 1
          %s678 = smul.addr %s677, 7
          %s679 = smul.addr %s678, 4
          %s680 = scalar_lea.vmem %s5, %s679
        $region68: #{tpu_custom_call.1} parent=63 // pred_fallthru
          _
      $region64: #{tpu_custom_call.1} parent=5 // pred_fallthru
        _
    $region6: #{tpu_custom_call.1} parent=1 // loop_footer
      %s20 = sadd.s32 1, %s16
    $region7: #{tpu_custom_call.1} parent=1 // loop_footer_branch
      %15 = sbr.rel target = $region3
    $region8: #{tpu_custom_call.1} parent=1 // loop_exit
      _
    %681 = vsyncpa [#allocation3], 1
    %s682 = scalar_lea.sflag [#allocation3], 1
    %683 = vsyncpa %s682, 1
    %684 = vsyncpa [#allocation5], 1
    %685 = vsyncpa [#allocation8], 1

</llo_original>
